<compile_context>
chip_gen: v7x
topology: tpu7x:2x2x1
jax: 0.10.0
libtpu: 0.0.40
codegen_flags: <defaults>
</compile_context>

<pallas_src>
import functools

import jax
import jax.numpy as jnp
from jax import lax
from jax.experimental import pallas as pl
from jax.experimental.pallas import tpu as pltpu


# ----------------------------------------------------------------------------
# Pallas kernel: one grid step handles TB buckets.
#   q:(TB,qB,D)  k:(TB,bkt,D)  w:(TB,bkt,Dv)  ->  o:(1, qB, TB*Dv)
# Bucket j of the step is packed into output lanes [j*Dv, (j+1)*Dv).
# ----------------------------------------------------------------------------
def _lsh_block_kernel(q_ref, k_ref, w_ref, o_ref):
    tb = q_ref.shape[0]
    q = q_ref[...]
    k = k_ref[...]
    w = w_ref[...]
    # exp of the un-normalized scores (module semantics: no softmax / no
    # max-subtraction; numerically fragile for large-magnitude inputs, but it
    # matches the reference module).
    s = jnp.exp(
        lax.dot_general(
            q, k,
            dimension_numbers=(((2,), (2,)), ((0,), (0,))),
            preferred_element_type=jnp.float32))                 # (TB, qB, bkt) f32
    res = lax.dot_general(
        s.astype(w.dtype), w,
        dimension_numbers=(((2,), (1,)), ((0,), (0,))),
        preferred_element_type=jnp.float32)                      # (TB, qB, Dv) f32
    # Lane-dense packed store: (qB, TB*Dv) written in one shot.
    packed = jnp.concatenate([res[j] for j in range(tb)], axis=-1)
    o_ref[0] = packed.astype(o_ref.dtype)


def _choose_tb(nb, bytes_per_bucket, target_bytes=2 << 20, max_tb=64):
    """Largest divisor of nb that (a) keeps the per-step payload near
    `target_bytes`, (b) is <= max_tb, and (c) leaves >= 2 grid steps so the
    parallel grid axis can still shard across TensorCores (v7x megacore)."""
    cap = int(max(1, min(max_tb, target_bytes // max(1, bytes_per_bucket))))
    cap = min(cap, nb)
    best = 1
    for tb in range(1, cap + 1):
        if nb % tb != 0:
            continue
        if nb // tb >= 2 or nb == 1:
            best = tb
    return best


def _lsh_blocks_pallas(q_blocks, k_blocks, w_blocks, tb):
    """q_blocks:(nb,qB,D) k_blocks:(nb,bkt,D) w_blocks:(nb,bkt,Dv) -> packed
    (nb//tb, qB, tb*Dv) float32 output."""
    nb, qB, D = q_blocks.shape
    _, bkt, Dv = w_blocks.shape
    nsteps = nb // tb
    return pl.pallas_call(
        _lsh_block_kernel,
        out_shape=jax.ShapeDtypeStruct((nsteps, qB, tb * Dv), jnp.float32),
        grid=(nsteps,),
        in_specs=[
            pl.BlockSpec((tb, qB, D), lambda i: (i, 0, 0)),
            pl.BlockSpec((tb, bkt, D), lambda i: (i, 0, 0)),
            pl.BlockSpec((tb, bkt, Dv), lambda i: (i, 0, 0)),
        ],
        out_specs=pl.BlockSpec((1, qB, tb * Dv), lambda i: (i, 0, 0)),
        compiler_params=pltpu.CompilerParams(
            dimension_semantics=("parallel",)),
    )(q_blocks, k_blocks, w_blocks)


# ----------------------------------------------------------------------------
# Glue: gathers, block reshapes, inverse permutation.
# ----------------------------------------------------------------------------
def _select(matrix, indices):
    """matrix:[B,H,N,D], indices:[B,H,N] -> matrix gathered along axis 2."""
    return jnp.take_along_axis(matrix, indices[..., None], axis=2)


def cosine_hamming_lsh_forward(query, key, weight, K_sort_idx, Q_sort_idx,
                               bucket_size=64, compute_dtype=jnp.bfloat16):
    B, H, Nq, D = query.shape
    Nk = key.shape[2]
    Dv = weight.shape[3]
    if Nk % bucket_size != 0:
        raise ValueError("Nk must be divisible by bucket_size")
    num_blocks = Nk // bucket_size
    if Nq % num_blocks != 0:
        raise ValueError("Nq must be divisible by num_blocks")
    qB = Nq // num_blocks

    # Gather into LSH-sorted order (kept in plain JAX; cheap index plumbing).
    q_s = _select(query, Q_sort_idx).astype(compute_dtype)
    k_s = _select(key, K_sort_idx).astype(compute_dtype)
    w_s = _select(weight, K_sort_idx).astype(compute_dtype)

    nb = B * H * num_blocks
    q_blocks = q_s.reshape(nb, qB, D)
    k_blocks = k_s.reshape(nb, bucket_size, D)
    w_blocks = w_s.reshape(nb, bucket_size, Dv)

    itemsize = jnp.dtype(compute_dtype).itemsize
    bytes_per_bucket = itemsize * (qB * D + bucket_size * D + bucket_size * Dv)
    tb = _choose_tb(nb, bytes_per_bucket)
    nsteps = nb // tb

    # TODO(synk): optional input_attn_mask branch not implemented (mask=None path).
    out_packed = _lsh_blocks_pallas(q_blocks, k_blocks, w_blocks, tb)

    # Unpack lane-dense layout: (nsteps, qB, tb*Dv) -> (B, H, Nq, Dv).
    result = out_packed.reshape(nsteps, qB, tb, Dv)
    result = jnp.transpose(result, (0, 2, 1, 3)).reshape(B, H, Nq, Dv)
    result = result.astype(query.dtype)

    # Undo the query permutation with a direct scatter (replaces the
    # O(N log N) argsort + extra gather round trip).
    bidx = jnp.arange(B, dtype=Q_sort_idx.dtype)[:, None, None]
    hidx = jnp.arange(H, dtype=Q_sort_idx.dtype)[None, :, None]
    out = jnp.zeros((B, H, Nq, Dv), result.dtype)
    out = out.at[bidx, hidx, Q_sort_idx, :].set(result, unique_indices=True)
    return out


# Pure-JAX reference (module semantics, float32) for correctness checks.
def _reference(query, key, weight, K_sort_idx, Q_sort_idx, bucket_size=64):
    B, H, Nq, D = query.shape
    Nk = key.shape[2]
    Dv = weight.shape[3]
    num_blocks = Nk // bucket_size
    qB = Nq // num_blocks
    qs = _select(query, Q_sort_idx).reshape(-1, qB, D)
    ks = _select(key, K_sort_idx).reshape(-1, bucket_size, D)
    ws = _select(weight, K_sort_idx).reshape(-1, bucket_size, Dv)
    A = jnp.exp(jnp.einsum('bnd,bmd->bnm', qs, ks))
    res = jnp.einsum('bnm,bmd->bnd', A, ws).reshape(B, H, Nq, Dv)
    inv = jnp.argsort(Q_sort_idx, axis=2)
    return _select(res, inv)


if __name__ == "__main__":
    key0 = jax.random.PRNGKey(0)
    kq, kk, kw, kpq, kpk = jax.random.split(key0, 5)

    B, H = 2, 2
    D, Dv = 16, 16
    bucket_size = 64
    Nk = 128          # num_blocks = 2
    Nq = 128          # query_bucket_size = 64

    query = 0.2 * jax.random.normal(kq, (B, H, Nq, D), dtype=jnp.float32)
    key_t = 0.2 * jax.random.normal(kk, (B, H, Nk, D), dtype=jnp.float32)
    weight = jax.random.normal(kw, (B, H, Nk, Dv), dtype=jnp.float32)

    # Per-(b,h) permutations for the LSH sort indices.
    Q_sort_idx = jnp.argsort(
        jax.random.uniform(kpq, (B, H, Nq)), axis=2).astype(jnp.int32)
    K_sort_idx = jnp.argsort(
        jax.random.uniform(kpk, (B, H, Nk)), axis=2).astype(jnp.int32)

    ref = _reference(
        query, key_t, weight, K_sort_idx, Q_sort_idx, bucket_size=bucket_size)

    # Fast path: bf16 inputs, f32 accumulation.  Loose tolerance vs f32 ref.
    fwd = jax.jit(functools.partial(
        cosine_hamming_lsh_forward, bucket_size=bucket_size))
    out = jax.block_until_ready(
        fwd(query, key_t, weight, K_sort_idx, Q_sort_idx))
    assert out.shape == (B, H, Nq, Dv)
    assert jnp.allclose(out, ref, atol=5e-1, rtol=5e-2), \
        "bf16 kernel mismatch vs reference"

    # Precision path: f32 end-to-end, tight check of kernel + permutation plumbing.
    out_f32 = jax.block_until_ready(
        cosine_hamming_lsh_forward(
            query, key_t, weight, K_sort_idx, Q_sort_idx,
            bucket_size=bucket_size, compute_dtype=jnp.float32))
    assert jnp.allclose(out_f32, ref, atol=1e-3, rtol=1e-3), \
        "f32 kernel mismatch vs reference"

    print("KERNEL_OK")
</pallas_src>

<mosaic_0001>
module attributes {stable_mosaic.version = 11 : i64} {
  func.func @_lsh_block_kernel(%arg0: i32, %arg1: memref<4x64x16xbf16, #tpu.memory_space<vmem>>, %arg2: memref<4x64x16xbf16, #tpu.memory_space<vmem>>, %arg3: memref<4x64x16xbf16, #tpu.memory_space<vmem>>, %arg4: memref<1x64x64xf32, #tpu.memory_space<vmem>>) attributes {dimension_semantics = [#tpu.dimension_semantics<parallel>], iteration_bounds = array<i64: 2>, scalar_prefetch = 0 : i64, scratch_operands = 0 : i64, tpu.core_type = #tpu.core_type<tc>, window_params = [{transform_indices = @transform_0, window_bounds = array<i64: 4, 64, 16>}, {transform_indices = @transform_1, window_bounds = array<i64: 4, 64, 16>}, {transform_indices = @transform_2, window_bounds = array<i64: 4, 64, 16>}, {transform_indices = @transform_3, window_bounds = array<i64: 1, 64, 64>}]} {
    %c0 = arith.constant 0 : index
    %c0_0 = arith.constant 0 : index
    %c0_1 = arith.constant 0 : index
    %0 = vector.load %arg1[%c0, %c0_0, %c0_1] : memref<4x64x16xbf16, #tpu.memory_space<vmem>>, vector<4x64x16xbf16>
    %c0_2 = arith.constant 0 : index
    %c0_3 = arith.constant 0 : index
    %c0_4 = arith.constant 0 : index
    %1 = vector.load %arg2[%c0_2, %c0_3, %c0_4] : memref<4x64x16xbf16, #tpu.memory_space<vmem>>, vector<4x64x16xbf16>
    %c0_5 = arith.constant 0 : index
    %c0_6 = arith.constant 0 : index
    %c0_7 = arith.constant 0 : index
    %2 = vector.load %arg3[%c0_5, %c0_6, %c0_7] : memref<4x64x16xbf16, #tpu.memory_space<vmem>>, vector<4x64x16xbf16>
    %cst = arith.constant dense<0.000000e+00> : vector<4x64x64xf32>
    %3 = tpu.matmul %0, %1, %cst {dimension_numbers = #tpu.dot_dimension_numbers<[2], [2], [1], [1], [0, 0, 0, 1, 1, 1], [0], [0]>} : vector<4x64x16xbf16>, vector<4x64x16xbf16>, vector<4x64x64xf32> -> vector<4x64x64xf32>
    %4 = math.exp %3 : vector<4x64x64xf32>
    %5 = arith.truncf %4 : vector<4x64x64xf32> to vector<4x64x64xbf16>
    %cst_8 = arith.constant dense<0.000000e+00> : vector<4x64x16xf32>
    %6 = tpu.matmul %5, %2, %cst_8 {dimension_numbers = #tpu.dot_dimension_numbers<[2], [1], [1], [2], [0, 0, 0, 1, 1, 2], [0], [0]>} : vector<4x64x64xbf16>, vector<4x64x16xbf16>, vector<4x64x16xf32> -> vector<4x64x16xf32>
    %7 = vector.extract_strided_slice %6 {offsets = [0, 0, 0], sizes = [1, 64, 16], strides = [1, 1, 1]} : vector<4x64x16xf32> to vector<1x64x16xf32>
    %8 = vector.shape_cast %7 : vector<1x64x16xf32> to vector<64x16xf32>
    %9 = vector.extract_strided_slice %6 {offsets = [1, 0, 0], sizes = [1, 64, 16], strides = [1, 1, 1]} : vector<4x64x16xf32> to vector<1x64x16xf32>
    %10 = vector.shape_cast %9 : vector<1x64x16xf32> to vector<64x16xf32>
    %11 = vector.extract_strided_slice %6 {offsets = [2, 0, 0], sizes = [1, 64, 16], strides = [1, 1, 1]} : vector<4x64x16xf32> to vector<1x64x16xf32>
    %12 = vector.shape_cast %11 : vector<1x64x16xf32> to vector<64x16xf32>
    %13 = vector.extract_strided_slice %6 {offsets = [3, 0, 0], sizes = [1, 64, 16], strides = [1, 1, 1]} : vector<4x64x16xf32> to vector<1x64x16xf32>
    %14 = vector.shape_cast %13 : vector<1x64x16xf32> to vector<64x16xf32>
    %15 = tpu.concatenate %8, %10, %12, %14 in 1 : vector<64x16xf32>, vector<64x16xf32>, vector<64x16xf32>, vector<64x16xf32> -> vector<64x64xf32>
    %c0_9 = arith.constant 0 : index
    %c0_10 = arith.constant 0 : index
    %c0_11 = arith.constant 0 : index
    %16 = vector.load %arg4[%c0_9, %c0_10, %c0_11] : memref<1x64x64xf32, #tpu.memory_space<vmem>>, vector<1x64x64xf32>
    %17 = vector.shape_cast %16 : vector<1x64x64xf32> to vector<64x64xf32>
    %18 = vector.shape_cast %15 : vector<64x64xf32> to vector<1x64x64xf32>
    tpu.vector_store %arg4[%c0_9, %c0_10, %c0_11], %18 {strides = array<i32>} : memref<1x64x64xf32, #tpu.memory_space<vmem>>, vector<1x64x64xf32>,
    return
  }
  func.func @transform_0(%arg0: i32) -> (i32, i32, i32) {
    %c0_i32 = arith.constant 0 : i32
    %c0_i32_0 = arith.constant 0 : i32
    %c0_i32_1 = arith.constant 0 : i32
    return %arg0, %c0_i32, %c0_i32_0 : i32, i32, i32
  }
  func.func @transform_1(%arg0: i32) -> (i32, i32, i32) {
    %c0_i32 = arith.constant 0 : i32
    %c0_i32_0 = arith.constant 0 : i32
    %c0_i32_1 = arith.constant 0 : i32
    return %arg0, %c0_i32, %c0_i32_0 : i32, i32, i32
  }
  func.func @transform_2(%arg0: i32) -> (i32, i32, i32) {
    %c0_i32 = arith.constant 0 : i32
    %c0_i32_0 = arith.constant 0 : i32
    %c0_i32_1 = arith.constant 0 : i32
    return %arg0, %c0_i32, %c0_i32_0 : i32, i32, i32
  }
  func.func @transform_3(%arg0: i32) -> (i32, i32, i32) {
    %c0_i32 = arith.constant 0 : i32
    %c0_i32_0 = arith.constant 0 : i32
    %c0_i32_1 = arith.constant 0 : i32
    return %arg0, %c0_i32, %c0_i32_0 : i32, i32, i32
  }
}

</mosaic_0001>

<llo_original>
// kernel: cosine_hamming_lsh_forward.1
$region0: #{cosine_hamming_lsh_forward.1}
  #allocation0 [shape = 'u32[]', space=smem, size = 0x4, offset = 0x4, fixed_abs, tag = 'smem constant byte address 0x4 - core index']
  #allocation1 [shape = 'u32[144,128]{1,0:T(1,128)}', space=vmem, size = 0x12000, scoped, tag = 'internal scratch']
  %s0 = inlined_call_operand.vmem [shape: bf16[8,64,16], index: 0, kind: input, shape index: {}]
  %s1 = inlined_call_operand.vmem [shape: bf16[8,64,16], index: 1, kind: input, shape index: {}]
  %s2 = inlined_call_operand.vmem [shape: bf16[8,64,16], index: 2, kind: input, shape index: {}]
  %s3 = inlined_call_operand.vmem [shape: f32[2,64,64], index: 3, kind: output, shape index: {}]
  %s4 = sld [smem:[#allocation0]]
  $region45: #{cosine_hamming_lsh_forward.1} parent=0
    _
  %s6 = ssub.s32 1, %s4
  %s7 = scalar_select 0, %s6, %s4
  loop: start=0, step=1, limit=4
  $region2: #{cosine_hamming_lsh_forward.1} parent=0 // loop_pre_header
    _
  $region3: #{cosine_hamming_lsh_forward.1} parent=0 // loop_header
    %s9 = sphi 0, %s13
    %p10 = scmp.ge.s32.totalorder %s9, 4
    %s19 = sphi 0, %s21
    %s22 = sphi 0, %s19
    %s23 = sphi 0, %s22
    %s39 = sphi 0, %s23
    %s45 = sphi 0, %s47
    %s48 = sphi 0, %s45
    %s49 = sphi 0, %s48
    %s65 = sphi 0, %s49
    %s71 = sphi 0, %s73
    %s74 = sphi 0, %s71
    %s75 = sphi 0, %s74
    %s91 = sphi 0, %s75
    %s97 = sphi 0, %s99
    %s100 = sphi 0, %s97
    %s101 = sphi 0, %s100
    %s117 = sphi 0, %s101
  $region4: #{cosine_hamming_lsh_forward.1} parent=0 // loop_header_branch
    %12 = sbr.rel (%p10) target = $region8
  $region5: #{cosine_hamming_lsh_forward.1} parent=0 // loop_body
    %s14 = ssub.s32 %s9, 1
    %s15 = ssub.s32 %s9, 2
    %s16 = sadd.s32 %s9, 1
    %s17 = ssub.s32 %s9, %s16
    %p18 = scmp.eq.s32.totalorder %s17, 0
    %s20 = sadd.s32 %s19, 1
    %s21 = scalar_select %p18, %s19, %s20
    %p24 = pneg %p18
    %p25 = scmp.eq.s32.totalorder %s9, 1
    %p26 = por %p24, %p25
    %p27 = scmp.ne.s32.totalorder %s19, %s22
    %p28 = scmp.eq.s32.totalorder %s9, 0
    %p29 = por %p27, %p28
    %p30 = scmp.ne.s32.totalorder %s19, %s22
    %p31 = scmp.eq.s32.totalorder %s14, 1
    %p32 = por %p30, %p31
    %p33 = scmp.ne.s32.totalorder %s22, %s23
    %p34 = scmp.eq.s32.totalorder %s14, 0
    %p35 = por %p33, %p34
    %p36 = scmp.ne.s32.totalorder %s22, %s23
    %p37 = scmp.eq.s32.totalorder %s15, 1
    %p38 = por %p36, %p37
    %p40 = scmp.ne.s32.totalorder %s23, %s39
    %p41 = scmp.eq.s32.totalorder %s15, 0
    %p42 = por %p40, %p41
    %s43 = ssub.s32 %s9, %s16
    %p44 = scmp.eq.s32.totalorder %s43, 0
    %s46 = sadd.s32 %s45, 1
    %s47 = scalar_select %p44, %s45, %s46
    %p50 = pneg %p44
    %p51 = scmp.eq.s32.totalorder %s9, 1
    %p52 = por %p50, %p51
    %p53 = scmp.ne.s32.totalorder %s45, %s48
    %p54 = scmp.eq.s32.totalorder %s9, 0
    %p55 = por %p53, %p54
    %p56 = scmp.ne.s32.totalorder %s45, %s48
    %p57 = scmp.eq.s32.totalorder %s14, 1
    %p58 = por %p56, %p57
    %p59 = scmp.ne.s32.totalorder %s48, %s49
    %p60 = scmp.eq.s32.totalorder %s14, 0
    %p61 = por %p59, %p60
    %p62 = scmp.ne.s32.totalorder %s48, %s49
    %p63 = scmp.eq.s32.totalorder %s15, 1
    %p64 = por %p62, %p63
    %p66 = scmp.ne.s32.totalorder %s49, %s65
    %p67 = scmp.eq.s32.totalorder %s15, 0
    %p68 = por %p66, %p67
    %s69 = ssub.s32 %s9, %s16
    %p70 = scmp.eq.s32.totalorder %s69, 0
    %s72 = sadd.s32 %s71, 1
    %s73 = scalar_select %p70, %s71, %s72
    %p76 = pneg %p70
    %p77 = scmp.eq.s32.totalorder %s9, 1
    %p78 = por %p76, %p77
    %p79 = scmp.ne.s32.totalorder %s71, %s74
    %p80 = scmp.eq.s32.totalorder %s9, 0
    %p81 = por %p79, %p80
    %p82 = scmp.ne.s32.totalorder %s71, %s74
    %p83 = scmp.eq.s32.totalorder %s14, 1
    %p84 = por %p82, %p83
    %p85 = scmp.ne.s32.totalorder %s74, %s75
    %p86 = scmp.eq.s32.totalorder %s14, 0
    %p87 = por %p85, %p86
    %p88 = scmp.ne.s32.totalorder %s74, %s75
    %p89 = scmp.eq.s32.totalorder %s15, 1
    %p90 = por %p88, %p89
    %p92 = scmp.ne.s32.totalorder %s75, %s91
    %p93 = scmp.eq.s32.totalorder %s15, 0
    %p94 = por %p92, %p93
    %s95 = ssub.s32 %s9, %s16
    %p96 = scmp.eq.s32.totalorder %s95, 0
    %s98 = sadd.s32 %s97, 1
    %s99 = scalar_select %p96, %s97, %s98
    %p102 = pneg %p96
    %p103 = scmp.eq.s32.totalorder %s9, 1
    %p104 = por %p102, %p103
    %p105 = scmp.ne.s32.totalorder %s97, %s100
    %p106 = scmp.eq.s32.totalorder %s9, 0
    %p107 = por %p105, %p106
    %p108 = scmp.ne.s32.totalorder %s97, %s100
    %p109 = scmp.eq.s32.totalorder %s14, 1
    %p110 = por %p108, %p109
    %p111 = scmp.ne.s32.totalorder %s100, %s101
    %p112 = scmp.eq.s32.totalorder %s14, 0
    %p113 = por %p111, %p112
    %p114 = scmp.ne.s32.totalorder %s100, %s101
    %p115 = scmp.eq.s32.totalorder %s15, 1
    %p116 = por %p114, %p115
    %p118 = scmp.ne.s32.totalorder %s101, %s117
    %p119 = scmp.eq.s32.totalorder %s15, 0
    %p120 = por %p118, %p119
    %p121 = scmp.le.s32.totalorder 1, %s9
    %p122 = scmp.lt.s32.totalorder %s9, 3
    %p123 = pnand %p121, %p122
    %p124 = pneg %p123
    // Predicated region
    $region9: #{cosine_hamming_lsh_forward.1} parent=5 // pred_check
      _
    $region10: #{cosine_hamming_lsh_forward.1} parent=5 // pred_check_branch
      %126 = sbr.rel (%p123) target = $region12
    $region11: #{cosine_hamming_lsh_forward.1} parent=5 // pred_region
      %s127 = ssub.s32 %s9, 1
    $region12: #{cosine_hamming_lsh_forward.1} parent=5 // pred_fallthru
      _
    %p128 = scmp.lt.s32.totalorder %s9, 2
    // Predicated region
    $region13: #{cosine_hamming_lsh_forward.1} parent=5 // pred_check
      %p129 = pneg %p128
    $region14: #{cosine_hamming_lsh_forward.1} parent=5 // pred_check_branch
      %131 = sbr.rel (%p129) target = $region16
    $region15: #{cosine_hamming_lsh_forward.1} parent=5 // pred_region
      // Predicated region
      $region17: #{cosine_hamming_lsh_forward.1} parent=15 // pred_check
        %p132 = pneg %p29
      $region18: #{cosine_hamming_lsh_forward.1} parent=15 // pred_check_branch
        %134 = sbr.rel (%p132) target = $region20
      $region19: #{cosine_hamming_lsh_forward.1} parent=15 // pred_region
        %s135 = smul.u32 4, %s9
        %p136 = scmp.lt.s32.totalorder %s135, 7
        %s137 = scalar_select %p136, %s135, 7
        %s138 = smul.addr %s137, 8
        %s139 = smul.addr %s138, 4
        %s140 = scalar_lea.vmem %s0, %s139
        %s141 = smul.u32 4, %s9
      $region20: #{cosine_hamming_lsh_forward.1} parent=15 // pred_fallthru
        _
      // Predicated region
      $region21: #{cosine_hamming_lsh_forward.1} parent=15 // pred_check
        %p142 = pneg %p55
      $region22: #{cosine_hamming_lsh_forward.1} parent=15 // pred_check_branch
        %144 = sbr.rel (%p142) target = $region24
      $region23: #{cosine_hamming_lsh_forward.1} parent=15 // pred_region
        %s145 = smul.u32 4, %s9
        %p146 = scmp.lt.s32.totalorder %s145, 7
        %s147 = scalar_select %p146, %s145, 7
        %s148 = smul.addr %s147, 8
        %s149 = smul.addr %s148, 4
        %s150 = scalar_lea.vmem %s1, %s149
        %s151 = smul.u32 4, %s9
      $region24: #{cosine_hamming_lsh_forward.1} parent=15 // pred_fallthru
        _
      // Predicated region
      $region25: #{cosine_hamming_lsh_forward.1} parent=15 // pred_check
        %p152 = pneg %p81
      $region26: #{cosine_hamming_lsh_forward.1} parent=15 // pred_check_branch
        %154 = sbr.rel (%p152) target = $region28
      $region27: #{cosine_hamming_lsh_forward.1} parent=15 // pred_region
        %s155 = smul.u32 4, %s9
        %p156 = scmp.lt.s32.totalorder %s155, 7
        %s157 = scalar_select %p156, %s155, 7
        %s158 = smul.addr %s157, 8
        %s159 = smul.addr %s158, 4
        %s160 = scalar_lea.vmem %s2, %s159
        %s161 = smul.u32 4, %s9
      $region28: #{cosine_hamming_lsh_forward.1} parent=15 // pred_fallthru
        _
    $region16: #{cosine_hamming_lsh_forward.1} parent=5 // pred_fallthru
      _
    %p162 = scmp.le.s32.totalorder 1, %s9
    %p163 = scmp.lt.s32.totalorder %s9, 3
    %p164 = pnand %p162, %p163
    %p165 = pneg %p164
    // Predicated region
    $region29: #{cosine_hamming_lsh_forward.1} parent=5 // pred_check
      _
    $region30: #{cosine_hamming_lsh_forward.1} parent=5 // pred_check_branch
      %167 = sbr.rel (%p164) target = $region32
    $region31: #{cosine_hamming_lsh_forward.1} parent=5 // pred_region
      %s168 = ssub.s32 %s9, 1
      %s169 = smul.u32 4, %s14
      %p170 = scmp.lt.s32.totalorder %s169, 7
      %s171 = scalar_select %p170, %s169, 7
      %s172 = smul.addr %s171, 8
      %s173 = smul.addr %s172, 4
      %s174 = scalar_lea.vmem %s0, %s173
      %p175 = pneg %p35
      %p176 = pneg %p32
      %s177 = smul.u32 4, %s14
      %p178 = scmp.lt.s32.totalorder %s177, 7
      %s179 = scalar_select %p178, %s177, 7
      %s180 = smul.addr %s179, 8
      %s181 = smul.addr %s180, 4
      %s182 = scalar_lea.vmem %s1, %s181
      %p183 = pneg %p61
      %p184 = pneg %p58
      %s185 = smul.u32 4, %s14
      %p186 = scmp.lt.s32.totalorder %s185, 7
      %s187 = scalar_select %p186, %s185, 7
      %s188 = smul.addr %s187, 8
      %s189 = smul.addr %s188, 4
      %s190 = scalar_lea.vmem %s2, %s189
      %p191 = pneg %p87
      %p192 = pneg %p84
      %p193 = pneg %p113
      %p194 = pneg %p110
      %p195 = scmp.lt.s32.totalorder %s14, 1
      %s196 = scalar_select %p195, %s14, 1
      %s197 = smul.addr %s196, 8
      %s198 = smul.addr %s197, 8
      %s199 = scalar_lea.vmem %s3, %s198
      %s200 = smul.u32 4, %s14
      %p201 = scmp.lt.s32.totalorder %s200, 7
      %s202 = scalar_select %p201, %s200, 7
      %s203 = smul.addr %s202, 8
      %s204 = smul.addr %s203, 4
      %s205 = scalar_lea.vmem %s0, %s204
      %s206 = smul.u32 4, %s14
      %s207 = smul.u32 4, %s14
      %p208 = scmp.lt.s32.totalorder %s207, 7
      %s209 = scalar_select %p208, %s207, 7
      %s210 = smul.addr %s209, 8
      %s211 = smul.addr %s210, 4
      %s212 = scalar_lea.vmem %s1, %s211
      %s213 = smul.u32 4, %s14
      %s214 = smul.u32 4, %s14
      %p215 = scmp.lt.s32.totalorder %s214, 7
      %s216 = scalar_select %p215, %s214, 7
      %s217 = smul.addr %s216, 8
      %s218 = smul.addr %s217, 4
      %s219 = scalar_lea.vmem %s2, %s218
      %s220 = smul.u32 4, %s14
      %p221 = scmp.lt.s32.totalorder %s14, 1
      %s222 = scalar_select %p221, %s14, 1
      %s223 = smul.addr %s222, 8
      %s224 = smul.addr %s223, 8
      %s225 = scalar_lea.vmem %s3, %s224
      %v227 = vld [vmem:[%s205] sm:$0xf]
      %v228 = vld [vmem:[%s205 + $0x4] sm:$0xf]
      %v229 = vld [vmem:[%s205 + $0x8] sm:$0xf]
      %v230 = vld [vmem:[%s205 + $0xc] sm:$0xf]
      %v231 = vld [vmem:[%s205 + $0x10] sm:$0xf]
      %v232 = vld [vmem:[%s205 + $0x14] sm:$0xf]
      %v233 = vld [vmem:[%s205 + $0x18] sm:$0xf]
      %v234 = vld [vmem:[%s205 + $0x1c] sm:$0xf]
      %v235 = vld [vmem:[%s205 + $0x20] sm:$0xf]
      %v236 = vld [vmem:[%s205 + $0x24] sm:$0xf]
      %v237 = vld [vmem:[%s205 + $0x28] sm:$0xf]
      %v238 = vld [vmem:[%s205 + $0x2c] sm:$0xf]
      %v239 = vld [vmem:[%s205 + $0x30] sm:$0xf]
      %v240 = vld [vmem:[%s205 + $0x34] sm:$0xf]
      %v241 = vld [vmem:[%s205 + $0x38] sm:$0xf]
      %v242 = vld [vmem:[%s205 + $0x3c] sm:$0xf]
      %v243 = vld [vmem:[%s205 + $0x40] sm:$0xf]
      %v244 = vld [vmem:[%s205 + $0x44] sm:$0xf]
      %v245 = vld [vmem:[%s205 + $0x48] sm:$0xf]
      %v246 = vld [vmem:[%s205 + $0x4c] sm:$0xf]
      %v247 = vld [vmem:[%s205 + $0x50] sm:$0xf]
      %v248 = vld [vmem:[%s205 + $0x54] sm:$0xf]
      %v249 = vld [vmem:[%s205 + $0x58] sm:$0xf]
      %v250 = vld [vmem:[%s205 + $0x5c] sm:$0xf]
      %v251 = vld [vmem:[%s205 + $0x60] sm:$0xf]
      %v252 = vld [vmem:[%s205 + $0x64] sm:$0xf]
      %v253 = vld [vmem:[%s205 + $0x68] sm:$0xf]
      %v254 = vld [vmem:[%s205 + $0x6c] sm:$0xf]
      %v255 = vld [vmem:[%s205 + $0x70] sm:$0xf]
      %v256 = vld [vmem:[%s205 + $0x74] sm:$0xf]
      %v257 = vld [vmem:[%s205 + $0x78] sm:$0xf]
      %v258 = vld [vmem:[%s205 + $0x7c] sm:$0xf]
      %v259 = vld [vmem:[%s212] sm:$0xf]
      %v260 = vld [vmem:[%s212 + $0x4] sm:$0xf]
      %v261 = vld [vmem:[%s212 + $0x8] sm:$0xf]
      %v262 = vld [vmem:[%s212 + $0xc] sm:$0xf]
      %v263 = vld [vmem:[%s212 + $0x10] sm:$0xf]
      %v264 = vld [vmem:[%s212 + $0x14] sm:$0xf]
      %v265 = vld [vmem:[%s212 + $0x18] sm:$0xf]
      %v266 = vld [vmem:[%s212 + $0x1c] sm:$0xf]
      %v267 = vld [vmem:[%s212 + $0x20] sm:$0xf]
      %v268 = vld [vmem:[%s212 + $0x24] sm:$0xf]
      %v269 = vld [vmem:[%s212 + $0x28] sm:$0xf]
      %v270 = vld [vmem:[%s212 + $0x2c] sm:$0xf]
      %v271 = vld [vmem:[%s212 + $0x30] sm:$0xf]
      %v272 = vld [vmem:[%s212 + $0x34] sm:$0xf]
      %v273 = vld [vmem:[%s212 + $0x38] sm:$0xf]
      %v274 = vld [vmem:[%s212 + $0x3c] sm:$0xf]
      %v275 = vld [vmem:[%s212 + $0x40] sm:$0xf]
      %v276 = vld [vmem:[%s212 + $0x44] sm:$0xf]
      %v277 = vld [vmem:[%s212 + $0x48] sm:$0xf]
      %v278 = vld [vmem:[%s212 + $0x4c] sm:$0xf]
      %v279 = vld [vmem:[%s212 + $0x50] sm:$0xf]
      %v280 = vld [vmem:[%s212 + $0x54] sm:$0xf]
      %v281 = vld [vmem:[%s212 + $0x58] sm:$0xf]
      %v282 = vld [vmem:[%s212 + $0x5c] sm:$0xf]
      %v283 = vld [vmem:[%s212 + $0x60] sm:$0xf]
      %v284 = vld [vmem:[%s212 + $0x64] sm:$0xf]
      %v285 = vld [vmem:[%s212 + $0x68] sm:$0xf]
      %v286 = vld [vmem:[%s212 + $0x6c] sm:$0xf]
      %v287 = vld [vmem:[%s212 + $0x70] sm:$0xf]
      %v288 = vld [vmem:[%s212 + $0x74] sm:$0xf]
      %v289 = vld [vmem:[%s212 + $0x78] sm:$0xf]
      %v290 = vld [vmem:[%s212 + $0x7c] sm:$0xf]
      %v291 = vld [vmem:[%s219] sm:$0xf]
      %v292 = vld [vmem:[%s219 + $0x4] sm:$0xf]
      %v293 = vld [vmem:[%s219 + $0x8] sm:$0xf]
      %v294 = vld [vmem:[%s219 + $0xc] sm:$0xf]
      %v295 = vld [vmem:[%s219 + $0x10] sm:$0xf]
      %v296 = vld [vmem:[%s219 + $0x14] sm:$0xf]
      %v297 = vld [vmem:[%s219 + $0x18] sm:$0xf]
      %v298 = vld [vmem:[%s219 + $0x1c] sm:$0xf]
      %v299 = vld [vmem:[%s219 + $0x20] sm:$0xf]
      %v300 = vld [vmem:[%s219 + $0x24] sm:$0xf]
      %v301 = vld [vmem:[%s219 + $0x28] sm:$0xf]
      %v302 = vld [vmem:[%s219 + $0x2c] sm:$0xf]
      %v303 = vld [vmem:[%s219 + $0x30] sm:$0xf]
      %v304 = vld [vmem:[%s219 + $0x34] sm:$0xf]
      %v305 = vld [vmem:[%s219 + $0x38] sm:$0xf]
      %v306 = vld [vmem:[%s219 + $0x3c] sm:$0xf]
      %v307 = vld [vmem:[%s219 + $0x40] sm:$0xf]
      %v308 = vld [vmem:[%s219 + $0x44] sm:$0xf]
      %v309 = vld [vmem:[%s219 + $0x48] sm:$0xf]
      %v310 = vld [vmem:[%s219 + $0x4c] sm:$0xf]
      %v311 = vld [vmem:[%s219 + $0x50] sm:$0xf]
      %v312 = vld [vmem:[%s219 + $0x54] sm:$0xf]
      %v313 = vld [vmem:[%s219 + $0x58] sm:$0xf]
      %v314 = vld [vmem:[%s219 + $0x5c] sm:$0xf]
      %v315 = vld [vmem:[%s219 + $0x60] sm:$0xf]
      %v316 = vld [vmem:[%s219 + $0x64] sm:$0xf]
      %v317 = vld [vmem:[%s219 + $0x68] sm:$0xf]
      %v318 = vld [vmem:[%s219 + $0x6c] sm:$0xf]
      %v319 = vld [vmem:[%s219 + $0x70] sm:$0xf]
      %v320 = vld [vmem:[%s219 + $0x74] sm:$0xf]
      %v321 = vld [vmem:[%s219 + $0x78] sm:$0xf]
      %v322 = vld [vmem:[%s219 + $0x7c] sm:$0xf]
      %v331 = vunpack.c.l.b16 %v227
      %v332 = vunpack.c.l.b16 %v228
      %v333 = vunpack.c.l.b16 %v229
      %v334 = vunpack.c.l.b16 %v230
      %v335 = vunpack.c.l.b16 %v231
      %v336 = vunpack.c.l.b16 %v232
      %v337 = vunpack.c.l.b16 %v233
      %v338 = vunpack.c.l.b16 %v234
      %v339 = vpack.c.b16 %v332, %v331
      %v340 = vpack.c.b16 %v334, %v333
      %v341 = vpack.c.b16 %v336, %v335
      %v342 = vpack.c.b16 %v338, %v337
      %v351 = vunpack.c.l.b16 %v259
      %v352 = vunpack.c.l.b16 %v260
      %v353 = vunpack.c.l.b16 %v261
      %v354 = vunpack.c.l.b16 %v262
      %v355 = vunpack.c.l.b16 %v263
      %v356 = vunpack.c.l.b16 %v264
      %v357 = vunpack.c.l.b16 %v265
      %v358 = vunpack.c.l.b16 %v266
      %v359 = vpack.c.b16 %v352, %v351
      %v360 = vpack.c.b16 %v354, %v353
      %v361 = vpack.c.b16 %v356, %v355
      %v362 = vpack.c.b16 %v358, %v357
      %vm363 = vcmask 130048
      %v365 = vsel %vm363, %v339, 0
      %v368 = vsel %vm363, %v340, 0
      %v371 = vsel %vm363, %v341, 0
      %v374 = vsel %vm363, %v342, 0
      %v377 = vsel %vm363, %v359, 0
      %v380 = vsel %vm363, %v360, 0
      %v383 = vsel %vm363, %v361, 0
      %v386 = vsel %vm363, %v362, 0
      %388 = vmatprep.subr.bf16.mxu0 0
      %389 = vmatpush1.bf16.xpose.msra.mxu0 %v377
      %390 = vmatprep.subr.bf16.mxu0 0
      %391 = vmatpush1.bf16.xpose.msra.mxu0 %v380
      %392 = vmatprep.subr.bf16.mxu0 0
      %393 = vmatpush1.bf16.xpose.msra.mxu0 %v383
      %394 = vmatprep.subr.bf16.mxu0 0
      %395 = vmatpush1.bf16.xpose.msra.mxu0 %v386
      %396 = vmatprep.subr.bf16.mxu0 0
      %397 = vmatpush1.bf16.xpose.msra.mxu0 0
      %398 = vmatprep.subr.bf16.mxu0 0
      %399 = vmatpush1.bf16.xpose.msra.mxu0 0
      %400 = vmatprep.subr.bf16.mxu0 0
      %401 = vmatpush1.bf16.xpose.msra.mxu0 0
      %402 = vmatprep.subr.bf16.mxu0 0
      %403 = vmatpush1.bf16.xpose.msra.mxu0 0
      %404 = vmatprep.subr.bf16.mxu0 0
      %405 = vmatpush1.bf16.xpose.msra.mxu0 0
      %406 = vmatprep.subr.bf16.mxu0 0
      %407 = vmatpush1.bf16.xpose.msra.mxu0 0
      %408 = vmatprep.subr.bf16.mxu0 0
      %409 = vmatpush1.bf16.xpose.msra.mxu0 0
      %410 = vmatprep.subr.bf16.mxu0 0
      %411 = vmatpush1.bf16.xpose.msra.mxu0 0
      %412 = vmatprep.subr.bf16.mxu0 0
      %413 = vmatpush1.bf16.xpose.msra.mxu0 0
      %414 = vmatprep.subr.bf16.mxu0 0
      %415 = vmatpush1.bf16.xpose.msra.mxu0 0
      %416 = vmatprep.subr.bf16.mxu0 0
      %417 = vmatpush1.bf16.xpose.msra.mxu0 0
      %418 = vmatprep.subr.bf16.mxu0 0
      %419 = vmatpush1.bf16.xpose.msra.mxu0 0
      %420 = vmatprep.mubr.bf16.mxu0 0
      %421 = vmatmul.mubr.bf16.gmra.mrb[0].mxu0 %v365
      %v422 = vpop.f32.mrb[0].mxu0
      %v423 = vadd.f32 0.0, %v422
      %v424 = vpop.f32.mrb[0].mxu0
      %v425 = vpop.f32.mrb[0].mxu0
      %v426 = vadd.f32 0.0, %v425
      %v427 = vpop.f32.mrb[0].mxu0
      %428 = vmatprep.mubr.bf16.mxu0 0
      %429 = vmatmul.mubr.bf16.gmra.mrb[0].mxu0 %v368
      %v430 = vpop.f32.mrb[0].mxu0
      %v431 = vadd.f32 0.0, %v430
      %v432 = vpop.f32.mrb[0].mxu0
      %v433 = vpop.f32.mrb[0].mxu0
      %v434 = vadd.f32 0.0, %v433
      %v435 = vpop.f32.mrb[0].mxu0
      %436 = vmatprep.mubr.bf16.mxu0 0
      %437 = vmatmul.mubr.bf16.gmra.mrb[0].mxu0 %v371
      %v438 = vpop.f32.mrb[0].mxu0
      %v439 = vadd.f32 0.0, %v438
      %v440 = vpop.f32.mrb[0].mxu0
      %v441 = vpop.f32.mrb[0].mxu0
      %v442 = vadd.f32 0.0, %v441
      %v443 = vpop.f32.mrb[0].mxu0
      %444 = vmatprep.mubr.bf16.mxu0 0
      %445 = vmatmul.mubr.bf16.gmra.mrb[0].mxu0 %v374
      %v446 = vpop.f32.mrb[0].mxu0
      %v447 = vadd.f32 0.0, %v446
      %v448 = vpop.f32.mrb[0].mxu0
      %v449 = vpop.f32.mrb[0].mxu0
      %v450 = vadd.f32 0.0, %v449
      %v451 = vpop.f32.mrb[0].mxu0
      %452 = vdwg.mxu0
      %v461 = vunpack.c.l.b16 %v235
      %v462 = vunpack.c.l.b16 %v236
      %v463 = vunpack.c.l.b16 %v237
      %v464 = vunpack.c.l.b16 %v238
      %v465 = vunpack.c.l.b16 %v239
      %v466 = vunpack.c.l.b16 %v240
      %v467 = vunpack.c.l.b16 %v241
      %v468 = vunpack.c.l.b16 %v242
      %v469 = vpack.c.b16 %v462, %v461
      %v470 = vpack.c.b16 %v464, %v463
      %v471 = vpack.c.b16 %v466, %v465
      %v472 = vpack.c.b16 %v468, %v467
      %v481 = vunpack.c.l.b16 %v267
      %v482 = vunpack.c.l.b16 %v268
      %v483 = vunpack.c.l.b16 %v269
      %v484 = vunpack.c.l.b16 %v270
      %v485 = vunpack.c.l.b16 %v271
      %v486 = vunpack.c.l.b16 %v272
      %v487 = vunpack.c.l.b16 %v273
      %v488 = vunpack.c.l.b16 %v274
      %v489 = vpack.c.b16 %v482, %v481
      %v490 = vpack.c.b16 %v484, %v483
      %v491 = vpack.c.b16 %v486, %v485
      %v492 = vpack.c.b16 %v488, %v487
      %v494 = vsel %vm363, %v469, 0
      %v497 = vsel %vm363, %v470, 0
      %v500 = vsel %vm363, %v471, 0
      %v503 = vsel %vm363, %v472, 0
      %v506 = vsel %vm363, %v489, 0
      %v509 = vsel %vm363, %v490, 0
      %v512 = vsel %vm363, %v491, 0
      %v515 = vsel %vm363, %v492, 0
      %517 = vmatprep.subr.bf16.mxu0 0
      %518 = vmatpush1.bf16.xpose.msra.mxu0 %v506
      %519 = vmatprep.subr.bf16.mxu0 0
      %520 = vmatpush1.bf16.xpose.msra.mxu0 %v509
      %521 = vmatprep.subr.bf16.mxu0 0
      %522 = vmatpush1.bf16.xpose.msra.mxu0 %v512
      %523 = vmatprep.subr.bf16.mxu0 0
      %524 = vmatpush1.bf16.xpose.msra.mxu0 %v515
      %525 = vmatprep.subr.bf16.mxu0 0
      %526 = vmatpush1.bf16.xpose.msra.mxu0 0
      %527 = vmatprep.subr.bf16.mxu0 0
      %528 = vmatpush1.bf16.xpose.msra.mxu0 0
      %529 = vmatprep.subr.bf16.mxu0 0
      %530 = vmatpush1.bf16.xpose.msra.mxu0 0
      %531 = vmatprep.subr.bf16.mxu0 0
      %532 = vmatpush1.bf16.xpose.msra.mxu0 0
      %533 = vmatprep.subr.bf16.mxu0 0
      %534 = vmatpush1.bf16.xpose.msra.mxu0 0
      %535 = vmatprep.subr.bf16.mxu0 0
      %536 = vmatpush1.bf16.xpose.msra.mxu0 0
      %537 = vmatprep.subr.bf16.mxu0 0
      %538 = vmatpush1.bf16.xpose.msra.mxu0 0
      %539 = vmatprep.subr.bf16.mxu0 0
      %540 = vmatpush1.bf16.xpose.msra.mxu0 0
      %541 = vmatprep.subr.bf16.mxu0 0
      %542 = vmatpush1.bf16.xpose.msra.mxu0 0
      %543 = vmatprep.subr.bf16.mxu0 0
      %544 = vmatpush1.bf16.xpose.msra.mxu0 0
      %545 = vmatprep.subr.bf16.mxu0 0
      %546 = vmatpush1.bf16.xpose.msra.mxu0 0
      %547 = vmatprep.subr.bf16.mxu0 0
      %548 = vmatpush1.bf16.xpose.msra.mxu0 0
      %549 = vmatprep.mubr.bf16.mxu0 0
      %550 = vmatmul.mubr.bf16.gmra.mrb[0].mxu0 %v494
      %v551 = vpop.f32.mrb[0].mxu0
      %v552 = vadd.f32 0.0, %v551
      %v553 = vpop.f32.mrb[0].mxu0
      %v554 = vpop.f32.mrb[0].mxu0
      %v555 = vadd.f32 0.0, %v554
      %v556 = vpop.f32.mrb[0].mxu0
      %557 = vmatprep.mubr.bf16.mxu0 0
      %558 = vmatmul.mubr.bf16.gmra.mrb[0].mxu0 %v497
      %v559 = vpop.f32.mrb[0].mxu0
      %v560 = vadd.f32 0.0, %v559
      %v561 = vpop.f32.mrb[0].mxu0
      %v562 = vpop.f32.mrb[0].mxu0
      %v563 = vadd.f32 0.0, %v562
      %v564 = vpop.f32.mrb[0].mxu0
      %565 = vmatprep.mubr.bf16.mxu0 0
      %566 = vmatmul.mubr.bf16.gmra.mrb[0].mxu0 %v500
      %v567 = vpop.f32.mrb[0].mxu0
      %v568 = vadd.f32 0.0, %v567
      %v569 = vpop.f32.mrb[0].mxu0
      %v570 = vpop.f32.mrb[0].mxu0
      %v571 = vadd.f32 0.0, %v570
      %v572 = vpop.f32.mrb[0].mxu0
      %573 = vmatprep.mubr.bf16.mxu0 0
      %574 = vmatmul.mubr.bf16.gmra.mrb[0].mxu0 %v503
      %v575 = vpop.f32.mrb[0].mxu0
      %v576 = vadd.f32 0.0, %v575
      %v577 = vpop.f32.mrb[0].mxu0
      %v578 = vpop.f32.mrb[0].mxu0
      %v579 = vadd.f32 0.0, %v578
      %v580 = vpop.f32.mrb[0].mxu0
      %581 = vdwg.mxu0
      %v590 = vunpack.c.l.b16 %v243
      %v591 = vunpack.c.l.b16 %v244
      %v592 = vunpack.c.l.b16 %v245
      %v593 = vunpack.c.l.b16 %v246
      %v594 = vunpack.c.l.b16 %v247
      %v595 = vunpack.c.l.b16 %v248
      %v596 = vunpack.c.l.b16 %v249
      %v597 = vunpack.c.l.b16 %v250
      %v598 = vpack.c.b16 %v591, %v590
      %v599 = vpack.c.b16 %v593, %v592
      %v600 = vpack.c.b16 %v595, %v594
      %v601 = vpack.c.b16 %v597, %v596
      %v610 = vunpack.c.l.b16 %v275
      %v611 = vunpack.c.l.b16 %v276
      %v612 = vunpack.c.l.b16 %v277
      %v613 = vunpack.c.l.b16 %v278
      %v614 = vunpack.c.l.b16 %v279
      %v615 = vunpack.c.l.b16 %v280
      %v616 = vunpack.c.l.b16 %v281
      %v617 = vunpack.c.l.b16 %v282
      %v618 = vpack.c.b16 %v611, %v610
      %v619 = vpack.c.b16 %v613, %v612
      %v620 = vpack.c.b16 %v615, %v614
      %v621 = vpack.c.b16 %v617, %v616
      %v623 = vsel %vm363, %v598, 0
      %v626 = vsel %vm363, %v599, 0
      %v629 = vsel %vm363, %v600, 0
      %v632 = vsel %vm363, %v601, 0
      %v635 = vsel %vm363, %v618, 0
      %v638 = vsel %vm363, %v619, 0
      %v641 = vsel %vm363, %v620, 0
      %v644 = vsel %vm363, %v621, 0
      %646 = vmatprep.subr.bf16.mxu0 0
      %647 = vmatpush1.bf16.xpose.msra.mxu0 %v635
      %648 = vmatprep.subr.bf16.mxu0 0
      %649 = vmatpush1.bf16.xpose.msra.mxu0 %v638
      %650 = vmatprep.subr.bf16.mxu0 0
      %651 = vmatpush1.bf16.xpose.msra.mxu0 %v641
      %652 = vmatprep.subr.bf16.mxu0 0
      %653 = vmatpush1.bf16.xpose.msra.mxu0 %v644
      %654 = vmatprep.subr.bf16.mxu0 0
      %655 = vmatpush1.bf16.xpose.msra.mxu0 0
      %656 = vmatprep.subr.bf16.mxu0 0
      %657 = vmatpush1.bf16.xpose.msra.mxu0 0
      %658 = vmatprep.subr.bf16.mxu0 0
      %659 = vmatpush1.bf16.xpose.msra.mxu0 0
      %660 = vmatprep.subr.bf16.mxu0 0
      %661 = vmatpush1.bf16.xpose.msra.mxu0 0
      %662 = vmatprep.subr.bf16.mxu0 0
      %663 = vmatpush1.bf16.xpose.msra.mxu0 0
      %664 = vmatprep.subr.bf16.mxu0 0
      %665 = vmatpush1.bf16.xpose.msra.mxu0 0
      %666 = vmatprep.subr.bf16.mxu0 0
      %667 = vmatpush1.bf16.xpose.msra.mxu0 0
      %668 = vmatprep.subr.bf16.mxu0 0
      %669 = vmatpush1.bf16.xpose.msra.mxu0 0
      %670 = vmatprep.subr.bf16.mxu0 0
      %671 = vmatpush1.bf16.xpose.msra.mxu0 0
      %672 = vmatprep.subr.bf16.mxu0 0
      %673 = vmatpush1.bf16.xpose.msra.mxu0 0
      %674 = vmatprep.subr.bf16.mxu0 0
      %675 = vmatpush1.bf16.xpose.msra.mxu0 0
      %676 = vmatprep.subr.bf16.mxu0 0
      %677 = vmatpush1.bf16.xpose.msra.mxu0 0
      %678 = vmatprep.mubr.bf16.mxu0 0
      %679 = vmatmul.mubr.bf16.gmra.mrb[0].mxu0 %v623
      %v680 = vpop.f32.mrb[0].mxu0
      %v681 = vadd.f32 0.0, %v680
      %v682 = vpop.f32.mrb[0].mxu0
      %v683 = vpop.f32.mrb[0].mxu0
      %v684 = vadd.f32 0.0, %v683
      %v685 = vpop.f32.mrb[0].mxu0
      %686 = vmatprep.mubr.bf16.mxu0 0
      %687 = vmatmul.mubr.bf16.gmra.mrb[0].mxu0 %v626
      %v688 = vpop.f32.mrb[0].mxu0
      %v689 = vadd.f32 0.0, %v688
      %v690 = vpop.f32.mrb[0].mxu0
      %v691 = vpop.f32.mrb[0].mxu0
      %v692 = vadd.f32 0.0, %v691
      %v693 = vpop.f32.mrb[0].mxu0
      %694 = vmatprep.mubr.bf16.mxu0 0
      %695 = vmatmul.mubr.bf16.gmra.mrb[0].mxu0 %v629
      %v696 = vpop.f32.mrb[0].mxu0
      %v697 = vadd.f32 0.0, %v696
      %v698 = vpop.f32.mrb[0].mxu0
      %v699 = vpop.f32.mrb[0].mxu0
      %v700 = vadd.f32 0.0, %v699
      %v701 = vpop.f32.mrb[0].mxu0
      %702 = vmatprep.mubr.bf16.mxu0 0
      %703 = vmatmul.mubr.bf16.gmra.mrb[0].mxu0 %v632
      %v704 = vpop.f32.mrb[0].mxu0
      %v705 = vadd.f32 0.0, %v704
      %v706 = vpop.f32.mrb[0].mxu0
      %v707 = vpop.f32.mrb[0].mxu0
      %v708 = vadd.f32 0.0, %v707
      %v709 = vpop.f32.mrb[0].mxu0
      %710 = vdwg.mxu0
      %v719 = vunpack.c.l.b16 %v251
      %v720 = vunpack.c.l.b16 %v252
      %v721 = vunpack.c.l.b16 %v253
      %v722 = vunpack.c.l.b16 %v254
      %v723 = vunpack.c.l.b16 %v255
      %v724 = vunpack.c.l.b16 %v256
      %v725 = vunpack.c.l.b16 %v257
      %v726 = vunpack.c.l.b16 %v258
      %v727 = vpack.c.b16 %v720, %v719
      %v728 = vpack.c.b16 %v722, %v721
      %v729 = vpack.c.b16 %v724, %v723
      %v730 = vpack.c.b16 %v726, %v725
      %v739 = vunpack.c.l.b16 %v283
      %v740 = vunpack.c.l.b16 %v284
      %v741 = vunpack.c.l.b16 %v285
      %v742 = vunpack.c.l.b16 %v286
      %v743 = vunpack.c.l.b16 %v287
      %v744 = vunpack.c.l.b16 %v288
      %v745 = vunpack.c.l.b16 %v289
      %v746 = vunpack.c.l.b16 %v290
      %v747 = vpack.c.b16 %v740, %v739
      %v748 = vpack.c.b16 %v742, %v741
      %v749 = vpack.c.b16 %v744, %v743
      %v750 = vpack.c.b16 %v746, %v745
      %v752 = vsel %vm363, %v727, 0
      %v755 = vsel %vm363, %v728, 0
      %v758 = vsel %vm363, %v729, 0
      %v761 = vsel %vm363, %v730, 0
      %v764 = vsel %vm363, %v747, 0
      %v767 = vsel %vm363, %v748, 0
      %v770 = vsel %vm363, %v749, 0
      %v773 = vsel %vm363, %v750, 0
      %775 = vmatprep.subr.bf16.mxu0 0
      %776 = vmatpush1.bf16.xpose.msra.mxu0 %v764
      %777 = vmatprep.subr.bf16.mxu0 0
      %778 = vmatpush1.bf16.xpose.msra.mxu0 %v767
      %779 = vmatprep.subr.bf16.mxu0 0
      %780 = vmatpush1.bf16.xpose.msra.mxu0 %v770
      %781 = vmatprep.subr.bf16.mxu0 0
      %782 = vmatpush1.bf16.xpose.msra.mxu0 %v773
      %783 = vmatprep.subr.bf16.mxu0 0
      %784 = vmatpush1.bf16.xpose.msra.mxu0 0
      %785 = vmatprep.subr.bf16.mxu0 0
      %786 = vmatpush1.bf16.xpose.msra.mxu0 0
      %787 = vmatprep.subr.bf16.mxu0 0
      %788 = vmatpush1.bf16.xpose.msra.mxu0 0
      %789 = vmatprep.subr.bf16.mxu0 0
      %790 = vmatpush1.bf16.xpose.msra.mxu0 0
      %791 = vmatprep.subr.bf16.mxu0 0
      %792 = vmatpush1.bf16.xpose.msra.mxu0 0
      %793 = vmatprep.subr.bf16.mxu0 0
      %794 = vmatpush1.bf16.xpose.msra.mxu0 0
      %795 = vmatprep.subr.bf16.mxu0 0
      %796 = vmatpush1.bf16.xpose.msra.mxu0 0
      %797 = vmatprep.subr.bf16.mxu0 0
      %798 = vmatpush1.bf16.xpose.msra.mxu0 0
      %799 = vmatprep.subr.bf16.mxu0 0
      %800 = vmatpush1.bf16.xpose.msra.mxu0 0
      %801 = vmatprep.subr.bf16.mxu0 0
      %802 = vmatpush1.bf16.xpose.msra.mxu0 0
      %803 = vmatprep.subr.bf16.mxu0 0
      %804 = vmatpush1.bf16.xpose.msra.mxu0 0
      %805 = vmatprep.subr.bf16.mxu0 0
      %806 = vmatpush1.bf16.xpose.msra.mxu0 0
      %807 = vmatprep.mubr.bf16.mxu0 0
      %808 = vmatmul.mubr.bf16.gmra.mrb[0].mxu0 %v752
      %v809 = vpop.f32.mrb[0].mxu0
      %v810 = vadd.f32 0.0, %v809
      %v811 = vpop.f32.mrb[0].mxu0
      %v812 = vpop.f32.mrb[0].mxu0
      %v813 = vadd.f32 0.0, %v812
      %v814 = vpop.f32.mrb[0].mxu0
      %815 = vmatprep.mubr.bf16.mxu0 0
      %816 = vmatmul.mubr.bf16.gmra.mrb[0].mxu0 %v755
      %v817 = vpop.f32.mrb[0].mxu0
      %v818 = vadd.f32 0.0, %v817
      %v819 = vpop.f32.mrb[0].mxu0
      %v820 = vpop.f32.mrb[0].mxu0
      %v821 = vadd.f32 0.0, %v820
      %v822 = vpop.f32.mrb[0].mxu0
      %823 = vmatprep.mubr.bf16.mxu0 0
      %824 = vmatmul.mubr.bf16.gmra.mrb[0].mxu0 %v758
      %v825 = vpop.f32.mrb[0].mxu0
      %v826 = vadd.f32 0.0, %v825
      %v827 = vpop.f32.mrb[0].mxu0
      %v828 = vpop.f32.mrb[0].mxu0
      %v829 = vadd.f32 0.0, %v828
      %v830 = vpop.f32.mrb[0].mxu0
      %831 = vmatprep.mubr.bf16.mxu0 0
      %832 = vmatmul.mubr.bf16.gmra.mrb[0].mxu0 %v761
      %v833 = vpop.f32.mrb[0].mxu0
      %v834 = vadd.f32 0.0, %v833
      %v835 = vpop.f32.mrb[0].mxu0
      %v836 = vpop.f32.mrb[0].mxu0
      %v837 = vadd.f32 0.0, %v836
      %v838 = vpop.f32.mrb[0].mxu0
      %839 = vdwg.mxu0
      %v840 = vmul.f32 %v423, 1.442695
      %v841 = vpow.pop %v840
      %v842 = vmul.f32 %v426, 1.442695
      %v843 = vpow.pop %v842
      %v844 = vmul.f32 %v431, 1.442695
      %v845 = vpow.pop %v844
      %v846 = vmul.f32 %v434, 1.442695
      %v847 = vpow.pop %v846
      %v848 = vmul.f32 %v439, 1.442695
      %v849 = vpow.pop %v848
      %v850 = vmul.f32 %v442, 1.442695
      %v851 = vpow.pop %v850
      %v852 = vmul.f32 %v447, 1.442695
      %v853 = vpow.pop %v852
      %v854 = vmul.f32 %v450, 1.442695
      %v855 = vpow.pop %v854
      %v856 = vmul.f32 %v552, 1.442695
      %v857 = vpow.pop %v856
      %v858 = vmul.f32 %v555, 1.442695
      %v859 = vpow.pop %v858
      %v860 = vmul.f32 %v560, 1.442695
      %v861 = vpow.pop %v860
      %v862 = vmul.f32 %v563, 1.442695
      %v863 = vpow.pop %v862
      %v864 = vmul.f32 %v568, 1.442695
      %v865 = vpow.pop %v864
      %v866 = vmul.f32 %v571, 1.442695
      %v867 = vpow.pop %v866
      %v868 = vmul.f32 %v576, 1.442695
      %v869 = vpow.pop %v868
      %v870 = vmul.f32 %v579, 1.442695
      %v871 = vpow.pop %v870
      %v872 = vmul.f32 %v681, 1.442695
      %v873 = vpow.pop %v872
      %v874 = vmul.f32 %v684, 1.442695
      %v875 = vpow.pop %v874
      %v876 = vmul.f32 %v689, 1.442695
      %v877 = vpow.pop %v876
      %v878 = vmul.f32 %v692, 1.442695
      %v879 = vpow.pop %v878
      %v880 = vmul.f32 %v697, 1.442695
      %v881 = vpow.pop %v880
      %v882 = vmul.f32 %v700, 1.442695
      %v883 = vpow.pop %v882
      %v884 = vmul.f32 %v705, 1.442695
      %v885 = vpow.pop %v884
      %v886 = vmul.f32 %v708, 1.442695
      %v887 = vpow.pop %v886
      %v888 = vmul.f32 %v810, 1.442695
      %v889 = vpow.pop %v888
      %v890 = vmul.f32 %v813, 1.442695
      %v891 = vpow.pop %v890
      %v892 = vmul.f32 %v818, 1.442695
      %v893 = vpow.pop %v892
      %v894 = vmul.f32 %v821, 1.442695
      %v895 = vpow.pop %v894
      %v896 = vmul.f32 %v826, 1.442695
      %v897 = vpow.pop %v896
      %v898 = vmul.f32 %v829, 1.442695
      %v899 = vpow.pop %v898
      %v900 = vmul.f32 %v834, 1.442695
      %v901 = vpow.pop %v900
      %v902 = vmul.f32 %v837, 1.442695
      %v903 = vpow.pop %v902
      %v904 = vpack.c.bf16 %v843, %v841
      %v905 = vpack.c.bf16 %v847, %v845
      %v906 = vpack.c.bf16 %v851, %v849
      %v907 = vpack.c.bf16 %v855, %v853
      %v908 = vpack.c.bf16 %v859, %v857
      %v909 = vpack.c.bf16 %v863, %v861
      %v910 = vpack.c.bf16 %v867, %v865
      %v911 = vpack.c.bf16 %v871, %v869
      %v912 = vpack.c.bf16 %v875, %v873
      %v913 = vpack.c.bf16 %v879, %v877
      %v914 = vpack.c.bf16 %v883, %v881
      %v915 = vpack.c.bf16 %v887, %v885
      %v916 = vpack.c.bf16 %v891, %v889
      %v917 = vpack.c.bf16 %v895, %v893
      %v918 = vpack.c.bf16 %v899, %v897
      %v919 = vpack.c.bf16 %v903, %v901
      %v928 = vunpack.c.l.b16 %v291
      %v929 = vunpack.c.l.b16 %v292
      %v930 = vunpack.c.l.b16 %v293
      %v931 = vunpack.c.l.b16 %v294
      %v932 = vunpack.c.l.b16 %v295
      %v933 = vunpack.c.l.b16 %v296
      %v934 = vunpack.c.l.b16 %v297
      %v935 = vunpack.c.l.b16 %v298
      %v936 = vpack.c.b16 %v929, %v928
      %v937 = vpack.c.b16 %v931, %v930
      %v938 = vpack.c.b16 %v933, %v932
      %v939 = vpack.c.b16 %v935, %v934
      %vm944 = vcmask 523264
      %v946 = vsel %vm944, %v904, 0
      %v949 = vsel %vm944, %v905, 0
      %v952 = vsel %vm944, %v906, 0
      %v955 = vsel %vm944, %v907, 0
      %957 = vmatprep.subr.bf16.mxu0 0
      %958 = vmatpush1.bf16.msra.mxu0 %v936
      %959 = vmatprep.subr.bf16.mxu0 0
      %960 = vmatpush1.bf16.msra.mxu0 %v937
      %961 = vmatprep.subr.bf16.mxu0 0
      %962 = vmatpush1.bf16.msra.mxu0 %v938
      %963 = vmatprep.subr.bf16.mxu0 0
      %964 = vmatpush1.bf16.msra.mxu0 %v939
      %965 = vmatprep.subr.bf16.mxu0 0
      %966 = vmatpush1.bf16.msra.mxu0 0
      %967 = vmatprep.subr.bf16.mxu0 0
      %968 = vmatpush1.bf16.msra.mxu0 0
      %969 = vmatprep.subr.bf16.mxu0 0
      %970 = vmatpush1.bf16.msra.mxu0 0
      %971 = vmatprep.subr.bf16.mxu0 0
      %972 = vmatpush1.bf16.msra.mxu0 0
      %973 = vmatprep.subr.bf16.mxu0 0
      %974 = vmatpush1.bf16.msra.mxu0 0
      %975 = vmatprep.subr.bf16.mxu0 0
      %976 = vmatpush1.bf16.msra.mxu0 0
      %977 = vmatprep.subr.bf16.mxu0 0
      %978 = vmatpush1.bf16.msra.mxu0 0
      %979 = vmatprep.subr.bf16.mxu0 0
      %980 = vmatpush1.bf16.msra.mxu0 0
      %981 = vmatprep.subr.bf16.mxu0 0
      %982 = vmatpush1.bf16.msra.mxu0 0
      %983 = vmatprep.subr.bf16.mxu0 0
      %984 = vmatpush1.bf16.msra.mxu0 0
      %985 = vmatprep.subr.bf16.mxu0 0
      %986 = vmatpush1.bf16.msra.mxu0 0
      %987 = vmatprep.subr.bf16.mxu0 0
      %988 = vmatpush1.bf16.msra.mxu0 0
      %989 = vmatprep.mubr.bf16.mxu0 0
      %990 = vmatmul.mubr.bf16.gmra.mrb[0].mxu0 %v946
      %v991 = vpop.f32.mrb[0].mxu0
      %v992 = vadd.f32 0.0, %v991
      %v993 = vpop.f32.mrb[0].mxu0
      %v994 = vpop.f32.mrb[0].mxu0
      %v995 = vadd.f32 0.0, %v994
      %v996 = vpop.f32.mrb[0].mxu0
      %997 = vmatprep.mubr.bf16.mxu0 0
      %998 = vmatmul.mubr.bf16.gmra.mrb[0].mxu0 %v949
      %v999 = vpop.f32.mrb[0].mxu0
      %v1000 = vadd.f32 0.0, %v999
      %v1001 = vpop.f32.mrb[0].mxu0
      %v1002 = vpop.f32.mrb[0].mxu0
      %v1003 = vadd.f32 0.0, %v1002
      %v1004 = vpop.f32.mrb[0].mxu0
      %1005 = vmatprep.mubr.bf16.mxu0 0
      %1006 = vmatmul.mubr.bf16.gmra.mrb[0].mxu0 %v952
      %v1007 = vpop.f32.mrb[0].mxu0
      %v1008 = vadd.f32 0.0, %v1007
      %v1009 = vpop.f32.mrb[0].mxu0
      %v1010 = vpop.f32.mrb[0].mxu0
      %v1011 = vadd.f32 0.0, %v1010
      %v1012 = vpop.f32.mrb[0].mxu0
      %1013 = vmatprep.mubr.bf16.mxu0 0
      %1014 = vmatmul.mubr.bf16.gmra.mrb[0].mxu0 %v955
      %v1015 = vpop.f32.mrb[0].mxu0
      %v1016 = vadd.f32 0.0, %v1015
      %v1017 = vpop.f32.mrb[0].mxu0
      %v1018 = vpop.f32.mrb[0].mxu0
      %v1019 = vadd.f32 0.0, %v1018
      %v1020 = vpop.f32.mrb[0].mxu0
      %1021 = vdwg.mxu0
      %v1030 = vunpack.c.l.b16 %v299
      %v1031 = vunpack.c.l.b16 %v300
      %v1032 = vunpack.c.l.b16 %v301
      %v1033 = vunpack.c.l.b16 %v302
      %v1034 = vunpack.c.l.b16 %v303
      %v1035 = vunpack.c.l.b16 %v304
      %v1036 = vunpack.c.l.b16 %v305
      %v1037 = vunpack.c.l.b16 %v306
      %v1038 = vpack.c.b16 %v1031, %v1030
      %v1039 = vpack.c.b16 %v1033, %v1032
      %v1040 = vpack.c.b16 %v1035, %v1034
      %v1041 = vpack.c.b16 %v1037, %v1036
      %v1047 = vsel %vm944, %v908, 0
      %v1050 = vsel %vm944, %v909, 0
      %v1053 = vsel %vm944, %v910, 0
      %v1056 = vsel %vm944, %v911, 0
      %1058 = vmatprep.subr.bf16.mxu0 0
      %1059 = vmatpush1.bf16.msra.mxu0 %v1038
      %1060 = vmatprep.subr.bf16.mxu0 0
      %1061 = vmatpush1.bf16.msra.mxu0 %v1039
      %1062 = vmatprep.subr.bf16.mxu0 0
      %1063 = vmatpush1.bf16.msra.mxu0 %v1040
      %1064 = vmatprep.subr.bf16.mxu0 0
      %1065 = vmatpush1.bf16.msra.mxu0 %v1041
      %1066 = vmatprep.subr.bf16.mxu0 0
      %1067 = vmatpush1.bf16.msra.mxu0 0
      %1068 = vmatprep.subr.bf16.mxu0 0
      %1069 = vmatpush1.bf16.msra.mxu0 0
      %1070 = vmatprep.subr.bf16.mxu0 0
      %1071 = vmatpush1.bf16.msra.mxu0 0
      %1072 = vmatprep.subr.bf16.mxu0 0
      %1073 = vmatpush1.bf16.msra.mxu0 0
      %1074 = vmatprep.subr.bf16.mxu0 0
      %1075 = vmatpush1.bf16.msra.mxu0 0
      %1076 = vmatprep.subr.bf16.mxu0 0
      %1077 = vmatpush1.bf16.msra.mxu0 0
      %1078 = vmatprep.subr.bf16.mxu0 0
      %1079 = vmatpush1.bf16.msra.mxu0 0
      %1080 = vmatprep.subr.bf16.mxu0 0
      %1081 = vmatpush1.bf16.msra.mxu0 0
      %1082 = vmatprep.subr.bf16.mxu0 0
      %1083 = vmatpush1.bf16.msra.mxu0 0
      %1084 = vmatprep.subr.bf16.mxu0 0
      %1085 = vmatpush1.bf16.msra.mxu0 0
      %1086 = vmatprep.subr.bf16.mxu0 0
      %1087 = vmatpush1.bf16.msra.mxu0 0
      %1088 = vmatprep.subr.bf16.mxu0 0
      %1089 = vmatpush1.bf16.msra.mxu0 0
      %1090 = vmatprep.mubr.bf16.mxu0 0
      %1091 = vmatmul.mubr.bf16.gmra.mrb[0].mxu0 %v1047
      %v1092 = vpop.f32.mrb[0].mxu0
      %v1093 = vadd.f32 0.0, %v1092
      %v1094 = vpop.f32.mrb[0].mxu0
      %v1095 = vpop.f32.mrb[0].mxu0
      %v1096 = vadd.f32 0.0, %v1095
      %v1097 = vpop.f32.mrb[0].mxu0
      %1098 = vmatprep.mubr.bf16.mxu0 0
      %1099 = vmatmul.mubr.bf16.gmra.mrb[0].mxu0 %v1050
      %v1100 = vpop.f32.mrb[0].mxu0
      %v1101 = vadd.f32 0.0, %v1100
      %v1102 = vpop.f32.mrb[0].mxu0
      %v1103 = vpop.f32.mrb[0].mxu0
      %v1104 = vadd.f32 0.0, %v1103
      %v1105 = vpop.f32.mrb[0].mxu0
      %1106 = vmatprep.mubr.bf16.mxu0 0
      %1107 = vmatmul.mubr.bf16.gmra.mrb[0].mxu0 %v1053
      %v1108 = vpop.f32.mrb[0].mxu0
      %v1109 = vadd.f32 0.0, %v1108
      %v1110 = vpop.f32.mrb[0].mxu0
      %v1111 = vpop.f32.mrb[0].mxu0
      %v1112 = vadd.f32 0.0, %v1111
      %v1113 = vpop.f32.mrb[0].mxu0
      %1114 = vmatprep.mubr.bf16.mxu0 0
      %1115 = vmatmul.mubr.bf16.gmra.mrb[0].mxu0 %v1056
      %v1116 = vpop.f32.mrb[0].mxu0
      %v1117 = vadd.f32 0.0, %v1116
      %v1118 = vpop.f32.mrb[0].mxu0
      %v1119 = vpop.f32.mrb[0].mxu0
      %v1120 = vadd.f32 0.0, %v1119
      %v1121 = vpop.f32.mrb[0].mxu0
      %1122 = vdwg.mxu0
      %v1131 = vunpack.c.l.b16 %v307
      %v1132 = vunpack.c.l.b16 %v308
      %v1133 = vunpack.c.l.b16 %v309
      %v1134 = vunpack.c.l.b16 %v310
      %v1135 = vunpack.c.l.b16 %v311
      %v1136 = vunpack.c.l.b16 %v312
      %v1137 = vunpack.c.l.b16 %v313
      %v1138 = vunpack.c.l.b16 %v314
      %v1139 = vpack.c.b16 %v1132, %v1131
      %v1140 = vpack.c.b16 %v1134, %v1133
      %v1141 = vpack.c.b16 %v1136, %v1135
      %v1142 = vpack.c.b16 %v1138, %v1137
      %v1148 = vsel %vm944, %v912, 0
      %v1151 = vsel %vm944, %v913, 0
      %v1154 = vsel %vm944, %v914, 0
      %v1157 = vsel %vm944, %v915, 0
      %1159 = vmatprep.subr.bf16.mxu0 0
      %1160 = vmatpush1.bf16.msra.mxu0 %v1139
      %1161 = vmatprep.subr.bf16.mxu0 0
      %1162 = vmatpush1.bf16.msra.mxu0 %v1140
      %1163 = vmatprep.subr.bf16.mxu0 0
      %1164 = vmatpush1.bf16.msra.mxu0 %v1141
      %1165 = vmatprep.subr.bf16.mxu0 0
      %1166 = vmatpush1.bf16.msra.mxu0 %v1142
      %1167 = vmatprep.subr.bf16.mxu0 0
      %1168 = vmatpush1.bf16.msra.mxu0 0
      %1169 = vmatprep.subr.bf16.mxu0 0
      %1170 = vmatpush1.bf16.msra.mxu0 0
      %1171 = vmatprep.subr.bf16.mxu0 0
      %1172 = vmatpush1.bf16.msra.mxu0 0
      %1173 = vmatprep.subr.bf16.mxu0 0
      %1174 = vmatpush1.bf16.msra.mxu0 0
      %1175 = vmatprep.subr.bf16.mxu0 0
      %1176 = vmatpush1.bf16.msra.mxu0 0
      %1177 = vmatprep.subr.bf16.mxu0 0
      %1178 = vmatpush1.bf16.msra.mxu0 0
      %1179 = vmatprep.subr.bf16.mxu0 0
      %1180 = vmatpush1.bf16.msra.mxu0 0
      %1181 = vmatprep.subr.bf16.mxu0 0
      %1182 = vmatpush1.bf16.msra.mxu0 0
      %1183 = vmatprep.subr.bf16.mxu0 0
      %1184 = vmatpush1.bf16.msra.mxu0 0
      %1185 = vmatprep.subr.bf16.mxu0 0
      %1186 = vmatpush1.bf16.msra.mxu0 0
      %1187 = vmatprep.subr.bf16.mxu0 0
      %1188 = vmatpush1.bf16.msra.mxu0 0
      %1189 = vmatprep.subr.bf16.mxu0 0
      %1190 = vmatpush1.bf16.msra.mxu0 0
      %1191 = vmatprep.mubr.bf16.mxu0 0
      %1192 = vmatmul.mubr.bf16.gmra.mrb[0].mxu0 %v1148
      %v1193 = vpop.f32.mrb[0].mxu0
      %v1194 = vadd.f32 0.0, %v1193
      %v1195 = vpop.f32.mrb[0].mxu0
      %v1196 = vpop.f32.mrb[0].mxu0
      %v1197 = vadd.f32 0.0, %v1196
      %v1198 = vpop.f32.mrb[0].mxu0
      %1199 = vmatprep.mubr.bf16.mxu0 0
      %1200 = vmatmul.mubr.bf16.gmra.mrb[0].mxu0 %v1151
      %v1201 = vpop.f32.mrb[0].mxu0
      %v1202 = vadd.f32 0.0, %v1201
      %v1203 = vpop.f32.mrb[0].mxu0
      %v1204 = vpop.f32.mrb[0].mxu0
      %v1205 = vadd.f32 0.0, %v1204
      %v1206 = vpop.f32.mrb[0].mxu0
      %1207 = vmatprep.mubr.bf16.mxu0 0
      %1208 = vmatmul.mubr.bf16.gmra.mrb[0].mxu0 %v1154
      %v1209 = vpop.f32.mrb[0].mxu0
      %v1210 = vadd.f32 0.0, %v1209
      %v1211 = vpop.f32.mrb[0].mxu0
      %v1212 = vpop.f32.mrb[0].mxu0
      %v1213 = vadd.f32 0.0, %v1212
      %v1214 = vpop.f32.mrb[0].mxu0
      %1215 = vmatprep.mubr.bf16.mxu0 0
      %1216 = vmatmul.mubr.bf16.gmra.mrb[0].mxu0 %v1157
      %v1217 = vpop.f32.mrb[0].mxu0
      %v1218 = vadd.f32 0.0, %v1217
      %v1219 = vpop.f32.mrb[0].mxu0
      %v1220 = vpop.f32.mrb[0].mxu0
      %v1221 = vadd.f32 0.0, %v1220
      %v1222 = vpop.f32.mrb[0].mxu0
      %1223 = vdwg.mxu0
      %v1232 = vunpack.c.l.b16 %v315
      %v1233 = vunpack.c.l.b16 %v316
      %v1234 = vunpack.c.l.b16 %v317
      %v1235 = vunpack.c.l.b16 %v318
      %v1236 = vunpack.c.l.b16 %v319
      %v1237 = vunpack.c.l.b16 %v320
      %v1238 = vunpack.c.l.b16 %v321
      %v1239 = vunpack.c.l.b16 %v322
      %v1240 = vpack.c.b16 %v1233, %v1232
      %v1241 = vpack.c.b16 %v1235, %v1234
      %v1242 = vpack.c.b16 %v1237, %v1236
      %v1243 = vpack.c.b16 %v1239, %v1238
      %v1249 = vsel %vm944, %v916, 0
      %v1252 = vsel %vm944, %v917, 0
      %v1255 = vsel %vm944, %v918, 0
      %v1258 = vsel %vm944, %v919, 0
      %1260 = vmatprep.subr.bf16.mxu0 0
      %1261 = vmatpush1.bf16.msra.mxu0 %v1240
      %1262 = vmatprep.subr.bf16.mxu0 0
      %1263 = vmatpush1.bf16.msra.mxu0 %v1241
      %1264 = vmatprep.subr.bf16.mxu0 0
      %1265 = vmatpush1.bf16.msra.mxu0 %v1242
      %1266 = vmatprep.subr.bf16.mxu0 0
      %1267 = vmatpush1.bf16.msra.mxu0 %v1243
      %1268 = vmatprep.subr.bf16.mxu0 0
      %1269 = vmatpush1.bf16.msra.mxu0 0
      %1270 = vmatprep.subr.bf16.mxu0 0
      %1271 = vmatpush1.bf16.msra.mxu0 0
      %1272 = vmatprep.subr.bf16.mxu0 0
      %1273 = vmatpush1.bf16.msra.mxu0 0
      %1274 = vmatprep.subr.bf16.mxu0 0
      %1275 = vmatpush1.bf16.msra.mxu0 0
      %1276 = vmatprep.subr.bf16.mxu0 0
      %1277 = vmatpush1.bf16.msra.mxu0 0
      %1278 = vmatprep.subr.bf16.mxu0 0
      %1279 = vmatpush1.bf16.msra.mxu0 0
      %1280 = vmatprep.subr.bf16.mxu0 0
      %1281 = vmatpush1.bf16.msra.mxu0 0
      %1282 = vmatprep.subr.bf16.mxu0 0
      %1283 = vmatpush1.bf16.msra.mxu0 0
      %1284 = vmatprep.subr.bf16.mxu0 0
      %1285 = vmatpush1.bf16.msra.mxu0 0
      %1286 = vmatprep.subr.bf16.mxu0 0
      %1287 = vmatpush1.bf16.msra.mxu0 0
      %1288 = vmatprep.subr.bf16.mxu0 0
      %1289 = vmatpush1.bf16.msra.mxu0 0
      %1290 = vmatprep.subr.bf16.mxu0 0
      %1291 = vmatpush1.bf16.msra.mxu0 0
      %1292 = vmatprep.mubr.bf16.mxu0 0
      %1293 = vmatmul.mubr.bf16.gmra.mrb[0].mxu0 %v1249
      %v1294 = vpop.f32.mrb[0].mxu0
      %v1295 = vadd.f32 0.0, %v1294
      %v1296 = vpop.f32.mrb[0].mxu0
      %v1297 = vpop.f32.mrb[0].mxu0
      %v1298 = vadd.f32 0.0, %v1297
      %v1299 = vpop.f32.mrb[0].mxu0
      %1300 = vmatprep.mubr.bf16.mxu0 0
      %1301 = vmatmul.mubr.bf16.gmra.mrb[0].mxu0 %v1252
      %v1302 = vpop.f32.mrb[0].mxu0
      %v1303 = vadd.f32 0.0, %v1302
      %v1304 = vpop.f32.mrb[0].mxu0
      %v1305 = vpop.f32.mrb[0].mxu0
      %v1306 = vadd.f32 0.0, %v1305
      %v1307 = vpop.f32.mrb[0].mxu0
      %1308 = vmatprep.mubr.bf16.mxu0 0
      %1309 = vmatmul.mubr.bf16.gmra.mrb[0].mxu0 %v1255
      %v1310 = vpop.f32.mrb[0].mxu0
      %v1311 = vadd.f32 0.0, %v1310
      %v1312 = vpop.f32.mrb[0].mxu0
      %v1313 = vpop.f32.mrb[0].mxu0
      %v1314 = vadd.f32 0.0, %v1313
      %v1315 = vpop.f32.mrb[0].mxu0
      %1316 = vmatprep.mubr.bf16.mxu0 0
      %1317 = vmatmul.mubr.bf16.gmra.mrb[0].mxu0 %v1258
      %v1318 = vpop.f32.mrb[0].mxu0
      %v1319 = vadd.f32 0.0, %v1318
      %v1320 = vpop.f32.mrb[0].mxu0
      %v1321 = vpop.f32.mrb[0].mxu0
      %v1322 = vadd.f32 0.0, %v1321
      %v1323 = vpop.f32.mrb[0].mxu0
      %1324 = vdwg.mxu0
      %1333 = vrot.lane.b32.xlu0 %v1093, 16
      %v1334 = vpop.permute.xlu0 %1333
      %1335 = vrot.lane.b32.xlu0 %v1096, 16
      %v1336 = vpop.permute.xlu0 %1335
      %1337 = vrot.lane.b32.xlu0 %v1101, 16
      %v1338 = vpop.permute.xlu0 %1337
      %1339 = vrot.lane.b32.xlu0 %v1104, 16
      %v1340 = vpop.permute.xlu0 %1339
      %1341 = vrot.lane.b32.xlu0 %v1109, 16
      %v1342 = vpop.permute.xlu0 %1341
      %1343 = vrot.lane.b32.xlu0 %v1112, 16
      %v1344 = vpop.permute.xlu0 %1343
      %1345 = vrot.lane.b32.xlu0 %v1117, 16
      %v1346 = vpop.permute.xlu0 %1345
      %1347 = vrot.lane.b32.xlu0 %v1120, 16
      %v1348 = vpop.permute.xlu0 %1347
      %1365 = vrot.lane.b32.xlu0 %v1194, 32
      %v1366 = vpop.permute.xlu0 %1365
      %1367 = vrot.lane.b32.xlu0 %v1197, 32
      %v1368 = vpop.permute.xlu0 %1367
      %1369 = vrot.lane.b32.xlu0 %v1202, 32
      %v1370 = vpop.permute.xlu0 %1369
      %1371 = vrot.lane.b32.xlu0 %v1205, 32
      %v1372 = vpop.permute.xlu0 %1371
      %1373 = vrot.lane.b32.xlu0 %v1210, 32
      %v1374 = vpop.permute.xlu0 %1373
      %1375 = vrot.lane.b32.xlu0 %v1213, 32
      %v1376 = vpop.permute.xlu0 %1375
      %1377 = vrot.lane.b32.xlu0 %v1218, 32
      %v1378 = vpop.permute.xlu0 %1377
      %1379 = vrot.lane.b32.xlu0 %v1221, 32
      %v1380 = vpop.permute.xlu0 %1379
      %1397 = vrot.lane.b32.xlu0 %v1295, 48
      %v1398 = vpop.permute.xlu0 %1397
      %1399 = vrot.lane.b32.xlu0 %v1298, 48
      %v1400 = vpop.permute.xlu0 %1399
      %1401 = vrot.lane.b32.xlu0 %v1303, 48
      %v1402 = vpop.permute.xlu0 %1401
      %1403 = vrot.lane.b32.xlu0 %v1306, 48
      %v1404 = vpop.permute.xlu0 %1403
      %1405 = vrot.lane.b32.xlu0 %v1311, 48
      %v1406 = vpop.permute.xlu0 %1405
      %1407 = vrot.lane.b32.xlu0 %v1314, 48
      %v1408 = vpop.permute.xlu0 %1407
      %1409 = vrot.lane.b32.xlu0 %v1319, 48
      %v1410 = vpop.permute.xlu0 %1409
      %1411 = vrot.lane.b32.xlu0 %v1322, 48
      %v1412 = vpop.permute.xlu0 %1411
      %v1421 = vsel %vm363, %v992, %v1334
      %v1422 = vsel %vm363, %v995, %v1336
      %v1423 = vsel %vm363, %v1000, %v1338
      %v1424 = vsel %vm363, %v1003, %v1340
      %v1425 = vsel %vm363, %v1008, %v1342
      %v1426 = vsel %vm363, %v1011, %v1344
      %v1427 = vsel %vm363, %v1016, %v1346
      %v1428 = vsel %vm363, %v1019, %v1348
      %vm1429 = vcmask 261120
      %v1430 = vsel %vm1429, %v1421, %v1366
      %v1431 = vsel %vm1429, %v1422, %v1368
      %v1432 = vsel %vm1429, %v1423, %v1370
      %v1433 = vsel %vm1429, %v1424, %v1372
      %v1434 = vsel %vm1429, %v1425, %v1374
      %v1435 = vsel %vm1429, %v1426, %v1376
      %v1436 = vsel %vm1429, %v1427, %v1378
      %v1437 = vsel %vm1429, %v1428, %v1380
      %vm1438 = vcmask 392192
      %v1439 = vsel %vm1438, %v1430, %v1398
      %v1440 = vsel %vm1438, %v1431, %v1400
      %v1441 = vsel %vm1438, %v1432, %v1402
      %v1442 = vsel %vm1438, %v1433, %v1404
      %v1443 = vsel %vm1438, %v1434, %v1406
      %v1444 = vsel %vm1438, %v1435, %v1408
      %v1445 = vsel %vm1438, %v1436, %v1410
      %v1446 = vsel %vm1438, %v1437, %v1412
      %1447 = vst.msk [vmem:[%s225] sm:$0xff] %vm944, %v1439
      %1448 = vst.msk [vmem:[%s225 + $0x8] sm:$0xff] %vm944, %v1440
      %1449 = vst.msk [vmem:[%s225 + $0x10] sm:$0xff] %vm944, %v1441
      %1450 = vst.msk [vmem:[%s225 + $0x18] sm:$0xff] %vm944, %v1442
      %1451 = vst.msk [vmem:[%s225 + $0x20] sm:$0xff] %vm944, %v1443
      %1452 = vst.msk [vmem:[%s225 + $0x28] sm:$0xff] %vm944, %v1444
      %1453 = vst.msk [vmem:[%s225 + $0x30] sm:$0xff] %vm944, %v1445
      %1454 = vst.msk [vmem:[%s225 + $0x38] sm:$0xff] %vm944, %v1446
      %p1455 = scmp.lt.s32.totalorder %s14, 1
      %s1456 = scalar_select %p1455, %s14, 1
      %s1457 = smul.addr %s1456, 8
      %s1458 = smul.addr %s1457, 8
      %s1459 = scalar_lea.vmem %s3, %s1458
      // Predicated region
      $region33: #{cosine_hamming_lsh_forward.1} parent=31 // pred_check
        %p1460 = pneg %p110
      $region34: #{cosine_hamming_lsh_forward.1} parent=31 // pred_check_branch
        %1462 = sbr.rel (%p1460) target = $region36
      $region35: #{cosine_hamming_lsh_forward.1} parent=31 // pred_region
        _
      $region36: #{cosine_hamming_lsh_forward.1} parent=31 // pred_fallthru
        _
    $region32: #{cosine_hamming_lsh_forward.1} parent=5 // pred_fallthru
      _
    %p1463 = scmp.le.s32.totalorder 2, %s9
    // Predicated region
    $region37: #{cosine_hamming_lsh_forward.1} parent=5 // pred_check
      %p1464 = pneg %p1463
    $region38: #{cosine_hamming_lsh_forward.1} parent=5 // pred_check_branch
      %1466 = sbr.rel (%p1464) target = $region40
    $region39: #{cosine_hamming_lsh_forward.1} parent=5 // pred_region
      %s1467 = ssub.s32 %s9, 2
      // Predicated region
      $region41: #{cosine_hamming_lsh_forward.1} parent=39 // pred_check
        %p1468 = pneg %p116
      $region42: #{cosine_hamming_lsh_forward.1} parent=39 // pred_check_branch
        %1470 = sbr.rel (%p1468) target = $region44
      $region43: #{cosine_hamming_lsh_forward.1} parent=39 // pred_region
        %p1471 = scmp.lt.s32.totalorder %s15, 1
        %s1472 = scalar_select %p1471, %s15, 1
        %s1473 = smul.addr %s1472, 8
        %s1474 = smul.addr %s1473, 8
        %s1475 = scalar_lea.vmem %s3, %s1474
      $region44: #{cosine_hamming_lsh_forward.1} parent=39 // pred_fallthru
        _
    $region40: #{cosine_hamming_lsh_forward.1} parent=5 // pred_fallthru
      _
  $region6: #{cosine_hamming_lsh_forward.1} parent=0 // loop_footer
    %s13 = sadd.s32 1, %s9
  $region7: #{cosine_hamming_lsh_forward.1} parent=0 // loop_footer_branch
    %8 = sbr.rel target = $region3
  $region8: #{cosine_hamming_lsh_forward.1} parent=0 // loop_exit
    _

</llo_original>
